<compile_context>
chip_gen: v5e
topology: v5e:2x2
jax: 0.10.0
libtpu: 0.0.40
codegen_flags: <defaults>
</compile_context>

<pallas_src>
import jax
import jax.numpy as jnp
import numpy as np
from jax.experimental import pallas as pl
from jax.experimental.pallas import tpu as pltpu  # noqa: F401  (TPU backend)

# ---- problem sizes (small, consistent with the module) -----------------
N = 1            # batch (forward() squeezes -> per-fold output is a vector of 3)
C = 4            # input channels
H = 16
W = 16
HID = 32         # hidden width of each SplitBaseline head
NCLS = 3         # judge_class() iterates range(3) -> 3 classes
NUM_FOLDS = 10   # net_fold1 .. net_fold10
NF_USED = NUM_FOLDS - 1  # folds 1..9 actually contribute to the mean


def merge_split_kernel(x_ref, w1_ref, b1_ref, w2_ref, b2_ref, out_ref):
    """Single-step fused MergeSplitBaseline forward.

    x_ref  : [N, C, H*W]          input, flattened spatial on the lane axis
    w1_ref : [C, NF_USED*HID]     folds 1..9 first-linear weights, hidden-concat
    b1_ref : [1, NF_USED*HID]     folds 1..9 first-linear biases, hidden-concat
    w2_ref : [NF_USED*HID, NCLS]  folds 1..9 second-linear weights, stacked
    b2_ref : [1, NCLS]            sum of folds 1..9 second-linear biases
    out_ref: [N, NCLS]            mean over folds 1..9 of the per-fold logits
    """
    # Global average pool over spatial (single XLU cross-lane reduce).
    p = jnp.mean(x_ref[...], axis=-1)                                  # [N, C]

    # All nine fold heads in one dot each.
    h = jnp.dot(p, w1_ref[...], preferred_element_type=jnp.float32) + b1_ref[...]
    h = jnp.maximum(h, 0.0)                                            # [N, 9*HID]
    logits_sum = (jnp.dot(h, w2_ref[...], preferred_element_type=jnp.float32)
                  + b2_ref[...])                                       # [N, NCLS]

    out_ref[...] = logits_sum * (1.0 / float(NF_USED))


def merge_split_forward(x, w1, b1, w2, b2):
    """x: [N, C, H, W] float32.  Returns the fold-averaged logits, shape [NCLS].

    w1: [NUM_FOLDS, C, HID], b1: [NUM_FOLDS, HID],
    w2: [NUM_FOLDS, HID, NCLS], b2: [NUM_FOLDS, NCLS].
    """
    n, c, h, w = x.shape
    hw = h * w
    x3 = x.reshape(n, c, hw)                              # layout: N, C, H*W

    # Pure-glue weight packing: drop fold 0, concat folds 1..9 along hidden.
    w1_flat = jnp.transpose(w1[1:], (1, 0, 2)).reshape(c, NF_USED * HID)
    b1_flat = b1[1:].reshape(1, NF_USED * HID)
    w2_flat = w2[1:].reshape(NF_USED * HID, NCLS)
    b2_sum = b2[1:].sum(axis=0).reshape(1, NCLS)

    # Single grid step, everything resident in VMEM (working set < 64 KiB).
    out = pl.pallas_call(
        merge_split_kernel,
        out_shape=jax.ShapeDtypeStruct((n, NCLS), jnp.float32),
    )(x3, w1_flat, b1_flat, w2_flat, b2_sum)

    # torch forward() squeezes per-fold outputs; with batch=1 the result is [NCLS]
    return out[0]


def reference_forward(x, w1, b1, w2, b2):
    """Pure-JAX reference mirroring the PyTorch forward semantics."""
    n, c, h, w = x.shape
    p = x.reshape(n, c, h * w).mean(-1)                   # GAP, [N, C]
    fold_outs = []
    for f in range(NUM_FOLDS):
        hdn = jnp.maximum(p @ w1[f] + b1[f], 0.0)
        fold_outs.append((hdn @ w2[f] + b2[f]).squeeze())  # .squeeze() as in torch
    stacked = jnp.stack(fold_outs)                        # [10, NCLS]
    return stacked[1:10].mean(axis=0)                     # x[range(1,10), :].mean(0)


if __name__ == "__main__":
    key = jax.random.PRNGKey(0)
    kx, k1, k2, k3, k4 = jax.random.split(key, 5)

    x = jax.random.normal(kx, (N, C, H, W), dtype=jnp.float32)
    w1 = jax.random.normal(k1, (NUM_FOLDS, C, HID), dtype=jnp.float32) * 0.1
    b1 = jax.random.normal(k2, (NUM_FOLDS, HID), dtype=jnp.float32) * 0.1
    w2 = jax.random.normal(k3, (NUM_FOLDS, HID, NCLS), dtype=jnp.float32) * 0.1
    b2 = jax.random.normal(k4, (NUM_FOLDS, NCLS), dtype=jnp.float32) * 0.1

    out = merge_split_forward(x, w1, b1, w2, b2)
    out = jax.block_until_ready(out)

    ref = reference_forward(x, w1, b1, w2, b2)
    np.testing.assert_allclose(np.asarray(out), np.asarray(ref),
                               rtol=1e-5, atol=1e-5)
    print("KERNEL_OK")
</pallas_src>

<mosaic_0001>
module attributes {stable_mosaic.version = 11 : i64} {
  func.func @merge_split_kernel(%arg0: memref<1x4x256xf32, #tpu.memory_space<vmem>>, %arg1: memref<4x288xf32, #tpu.memory_space<vmem>>, %arg2: memref<1x288xf32, #tpu.memory_space<vmem>>, %arg3: memref<288x3xf32, #tpu.memory_space<vmem>>, %arg4: memref<1x3xf32, #tpu.memory_space<vmem>>, %arg5: memref<1x3xf32, #tpu.memory_space<vmem>>) attributes {dimension_semantics = [], scalar_prefetch = 0 : i64, scratch_operands = 0 : i64, tpu.core_type = #tpu.core_type<tc>} {
    %c0 = arith.constant 0 : index
    %c0_0 = arith.constant 0 : index
    %c0_1 = arith.constant 0 : index
    %0 = vector.load %arg0[%c0, %c0_0, %c0_1] : memref<1x4x256xf32, #tpu.memory_space<vmem>>, vector<1x4x256xf32>
    %cst = arith.constant dense<0.000000e+00> : vector<1x4xf32>
    %1 = vector.multi_reduction <add>, %0, %cst [2] : vector<1x4x256xf32> to vector<1x4xf32>
    %cst_2 = arith.constant 2.560000e+02 : f32
    %2 = vector.broadcast %cst_2 : f32 to vector<1x4xf32>
    %3 = arith.divf %1, %2 : vector<1x4xf32>
    %c0_3 = arith.constant 0 : index
    %c0_4 = arith.constant 0 : index
    %4 = vector.load %arg1[%c0_3, %c0_4] : memref<4x288xf32, #tpu.memory_space<vmem>>, vector<4x288xf32>
    %cst_5 = arith.constant dense<0.000000e+00> : vector<1x288xf32>
    %5 = tpu.matmul %3, %4, %cst_5 {dimension_numbers = #tpu.dot_dimension_numbers<[1], [0], [0], [1], [0, 0, 1, 1], [], []>} : vector<1x4xf32>, vector<4x288xf32>, vector<1x288xf32> -> vector<1x288xf32>
    %c0_6 = arith.constant 0 : index
    %c0_7 = arith.constant 0 : index
    %6 = vector.load %arg2[%c0_6, %c0_7] : memref<1x288xf32, #tpu.memory_space<vmem>>, vector<1x288xf32>
    %7 = arith.addf %5, %6 : vector<1x288xf32>
    %cst_8 = arith.constant 0.000000e+00 : f32
    %8 = vector.broadcast %cst_8 : f32 to vector<1x288xf32>
    %9 = arith.maximumf %7, %8 : vector<1x288xf32>
    %c0_9 = arith.constant 0 : index
    %c0_10 = arith.constant 0 : index
    %10 = vector.load %arg3[%c0_9, %c0_10] : memref<288x3xf32, #tpu.memory_space<vmem>>, vector<288x3xf32>
    %cst_11 = arith.constant dense<0.000000e+00> : vector<1x3xf32>
    %11 = tpu.matmul %9, %10, %cst_11 {dimension_numbers = #tpu.dot_dimension_numbers<[1], [0], [0], [1], [0, 0, 1, 1], [], []>} : vector<1x288xf32>, vector<288x3xf32>, vector<1x3xf32> -> vector<1x3xf32>
    %c0_12 = arith.constant 0 : index
    %c0_13 = arith.constant 0 : index
    %12 = vector.load %arg4[%c0_12, %c0_13] : memref<1x3xf32, #tpu.memory_space<vmem>>, vector<1x3xf32>
    %13 = arith.addf %11, %12 : vector<1x3xf32>
    %cst_14 = arith.constant 0.111111112 : f32
    %14 = vector.broadcast %cst_14 : f32 to vector<1x3xf32>
    %15 = arith.mulf %13, %14 : vector<1x3xf32>
    %c0_15 = arith.constant 0 : index
    %c0_16 = arith.constant 0 : index
    %16 = vector.load %arg5[%c0_15, %c0_16] : memref<1x3xf32, #tpu.memory_space<vmem>>, vector<1x3xf32>
    tpu.vector_store %arg5[%c0_15, %c0_16], %15 {strides = array<i32>} : memref<1x3xf32, #tpu.memory_space<vmem>>, vector<1x3xf32>,
    return
  }
}

</mosaic_0001>

<llo_original>
// kernel: tpu_custom_call.1
$region0: #{tpu_custom_call.1}
  #allocation0 [shape = 'u32[]', space=smem, size = 0x4, offset = 0x4, fixed_abs, tag = 'smem constant byte address 0x4 - core index']
  #allocation1 [shape = 'u32[72,128]{1,0:T(1,128)}', space=vmem, size = 0x9000, scoped, tag = 'internal scratch']
  %s0 = inlined_call_operand.vmem [shape: f32[1,4,256], index: 0, kind: input, shape index: {}]
  %s1 = inlined_call_operand.vmem [shape: f32[4,288], index: 1, kind: input, shape index: {}]
  %s2 = inlined_call_operand.vmem [shape: f32[1,288], index: 2, kind: input, shape index: {}]
  %s3 = inlined_call_operand.vmem [shape: f32[288,3], index: 3, kind: input, shape index: {}]
  %s4 = inlined_call_operand.vmem [shape: f32[1,3], index: 4, kind: input, shape index: {}]
  %s5 = inlined_call_operand.hbm [shape: f32[1,3], index: 5, kind: output, shape index: {}]
  %s6 = sld [smem:[#allocation0]]
  $region30: #{tpu_custom_call.1} parent=0
    _
  %s8 = ssub.s32 1, %s6
  %s9 = scalar_select 0, %s8, %s6
  $region1: #{tpu_custom_call.1} parent=0
    #allocation2 [shape = 'u8[512]{0}', space=vmem, size = 0x400, scoped, tag = 'output window, operand 0, single buffered']
    #allocation3 [shape = 's32[1]{0}', space=sflag, size = 0x4, scoped, tag = 'scoped memory for tpu_custom_call.1']
    %10 = vsyncpa [#allocation3], 0
    // Predicated region
    $region2: #{tpu_custom_call.1} parent=1 // pred_check
      _
    $region3: #{tpu_custom_call.1} parent=1 // pred_check_branch
      %12 = sbr.rel (0) target = $region5
    $region4: #{tpu_custom_call.1} parent=1 // pred_region
      _
    $region5: #{tpu_custom_call.1} parent=1 // pred_fallthru
      _
    // Predicated region
    $region6: #{tpu_custom_call.1} parent=1 // pred_check
      _
    $region7: #{tpu_custom_call.1} parent=1 // pred_check_branch
      %14 = sbr.rel (0) target = $region9
    $region8: #{tpu_custom_call.1} parent=1 // pred_region
      _
    $region9: #{tpu_custom_call.1} parent=1 // pred_fallthru
      _
    // Predicated region
    $region10: #{tpu_custom_call.1} parent=1 // pred_check
      _
    $region11: #{tpu_custom_call.1} parent=1 // pred_check_branch
      %16 = sbr.rel (0) target = $region13
    $region12: #{tpu_custom_call.1} parent=1 // pred_region
      _
    $region13: #{tpu_custom_call.1} parent=1 // pred_fallthru
      _
    // Predicated region
    $region14: #{tpu_custom_call.1} parent=1 // pred_check
      _
    $region15: #{tpu_custom_call.1} parent=1 // pred_check_branch
      %18 = sbr.rel (0) target = $region17
    $region16: #{tpu_custom_call.1} parent=1 // pred_region
      _
    $region17: #{tpu_custom_call.1} parent=1 // pred_fallthru
      _
    // Predicated region
    $region18: #{tpu_custom_call.1} parent=1 // pred_check
      _
    $region19: #{tpu_custom_call.1} parent=1 // pred_check_branch
      %20 = sbr.rel (0) target = $region21
    $region20: #{tpu_custom_call.1} parent=1 // pred_region
      _
    $region21: #{tpu_custom_call.1} parent=1 // pred_fallthru
      _
    %v21 = vld [vmem:[%s0] sm:$0xff]
    %23 = vst [vmem:[#allocation1] ss:$2 sm:$0xff] %v21
    %v24 = vld.sshfl [vmem:[#allocation1] sm:$0xff pattern:$0x75316420]
    %v25 = vld.sshfl [vmem:[#allocation1 + $0x8] sm:$0xff pattern:$0x75316420]
    %vm28 = vcmask 1043456
    %v29 = vsel %vm28, %v24, 0.0
    %v30 = vsel %vm28, %v25, 0.0
    %v31 = vadd.f32 %v29, %v30
    %32 = vadd.xlane.f32.xlu0 %v31
    %v33 = vpop.xlane.xlu0 %32
    %v34 = vrcp.pop 256.0
    %v35 = vmul.f32 256.0, %v34
    %v36 = vsub.f32 1.0, %v35
    %v37 = vmul.f32 %v34, %v36
    %v38 = vadd.f32 %v34, %v37
    %vm39 = vweird.f32 %v34
    %v40 = vsel %vm39, %v34, %v38
    %v41 = vmul.f32 %v33, %v40
    %v42 = vld [vmem:[%s1] sm:$0xff]
    %v43 = vld [vmem:[%s1 + $0x8] sm:$0xf]
    %v44 = vld [vmem:[%s2] sm:$0x7]
    %v46 = vlaneseq
    %v47 = vand.u32 %v46, 127
    %v48 = vperm.slane %v41, %v47
    %51 = vst [vmem:[#allocation1] ss:$2 sm:$0xff] %v42
    %s52 = scalar_lea.vmem [#allocation1], 16
    %53 = vst [vmem:[%s52] ss:$2 sm:$0xff] %v43
    %v54 = vld.sshfl [vmem:[#allocation1] sm:$0xff pattern:$0x75316420]
    %v55 = vld.sshfl [vmem:[#allocation1 + $0x8] sm:$0xff pattern:$0x75316420]
    %v56 = vld.sshfl [vmem:[#allocation1 + $0x10] sm:$0xff pattern:$0x75316420]
    %v58 = vperm.slane %v44, 0
    %v59 = vperm.slane %v44, 1
    %v60 = vperm.slane %v44, 2
    %vm64 = vcmask 31744
    %v65 = vsel %vm64, %v48, 0
    %v67 = vsel %vm28, %v54, 0
    %v69 = vsel %vm28, %v55, 0
    %v71 = vsel %vm28, %v56, 0
    %73 = vmatpush.msra.mxu0 0.0
    %74 = vmatpush.msra.mxu0 0.0
    %75 = vmatpush.msra.mxu0 0.0
    %76 = vmatpush.msra.mxu0 0.0
    %77 = vmatpush.msra.mxu0 0.0
    %78 = vmatpush.msra.mxu0 0.0
    %79 = vmatpush.msra.mxu0 0.0
    %80 = vmatpush.msra.mxu0 0.0
    %81 = vmatpush.msra.mxu0 0.0
    %82 = vmatpush.msra.mxu0 0.0
    %83 = vmatpush.msra.mxu0 0.0
    %84 = vmatpush.msra.mxu0 0.0
    %85 = vmatpush.msra.mxu0 0.0
    %86 = vmatpush.msra.mxu0 0.0
    %87 = vmatpush.msra.mxu0 0.0
    %88 = vmatpush.msra.mxu0 %v67
    %89 = vmatmul.f32.gmra.mxu0 %v65
    %v90 = vpop.f32.mrf.mxu0
    %v91 = vadd.f32 %v58, %v90
    %92 = vdwg.mxu0
    %93 = vmatpush.msra.mxu0 0.0
    %94 = vmatpush.msra.mxu0 0.0
    %95 = vmatpush.msra.mxu0 0.0
    %96 = vmatpush.msra.mxu0 0.0
    %97 = vmatpush.msra.mxu0 0.0
    %98 = vmatpush.msra.mxu0 0.0
    %99 = vmatpush.msra.mxu0 0.0
    %100 = vmatpush.msra.mxu0 0.0
    %101 = vmatpush.msra.mxu0 0.0
    %102 = vmatpush.msra.mxu0 0.0
    %103 = vmatpush.msra.mxu0 0.0
    %104 = vmatpush.msra.mxu0 0.0
    %105 = vmatpush.msra.mxu0 0.0
    %106 = vmatpush.msra.mxu0 0.0
    %107 = vmatpush.msra.mxu0 0.0
    %108 = vmatpush.msra.mxu0 %v69
    %109 = vmatmul.f32.gmra.mxu0 %v65
    %v110 = vpop.f32.mrf.mxu0
    %v111 = vadd.f32 %v59, %v110
    %112 = vdwg.mxu0
    %113 = vmatpush.msra.mxu0 0.0
    %114 = vmatpush.msra.mxu0 0.0
    %115 = vmatpush.msra.mxu0 0.0
    %116 = vmatpush.msra.mxu0 0.0
    %117 = vmatpush.msra.mxu0 0.0
    %118 = vmatpush.msra.mxu0 0.0
    %119 = vmatpush.msra.mxu0 0.0
    %120 = vmatpush.msra.mxu0 0.0
    %121 = vmatpush.msra.mxu0 0.0
    %122 = vmatpush.msra.mxu0 0.0
    %123 = vmatpush.msra.mxu0 0.0
    %124 = vmatpush.msra.mxu0 0.0
    %125 = vmatpush.msra.mxu0 0.0
    %126 = vmatpush.msra.mxu0 0.0
    %127 = vmatpush.msra.mxu0 0.0
    %128 = vmatpush.msra.mxu0 %v71
    %129 = vmatmul.f32.gmra.mxu0 %v65
    %v130 = vpop.f32.mrf.mxu0
    %v131 = vadd.f32 %v60, %v130
    %132 = vdwg.mxu0
    %v133 = vmax.f32 %v91, 0.0
    %v134 = vmax.f32 %v111, 0.0
    %v135 = vmax.f32 %v131, 0.0
    %v136 = vld [vmem:[%s3] sm:$0xff]
    %v137 = vld [vmem:[%s3 + $0x8] sm:$0xff]
    %v138 = vld [vmem:[%s3 + $0x10] sm:$0xff]
    %v139 = vld [vmem:[%s3 + $0x18] sm:$0xff]
    %v140 = vld [vmem:[%s3 + $0x20] sm:$0xff]
    %v141 = vld [vmem:[%s3 + $0x28] sm:$0xff]
    %v142 = vld [vmem:[%s3 + $0x30] sm:$0xff]
    %v143 = vld [vmem:[%s3 + $0x38] sm:$0xff]
    %v144 = vld [vmem:[%s3 + $0x40] sm:$0xff]
    %v145 = vld [vmem:[%s3 + $0x48] sm:$0xff]
    %v146 = vld [vmem:[%s3 + $0x50] sm:$0xff]
    %v147 = vld [vmem:[%s3 + $0x58] sm:$0xff]
    %v148 = vld [vmem:[%s3 + $0x60] sm:$0xff]
    %v149 = vld [vmem:[%s3 + $0x68] sm:$0xff]
    %v150 = vld [vmem:[%s3 + $0x70] sm:$0xff]
    %v151 = vld [vmem:[%s3 + $0x78] sm:$0xff]
    %v152 = vld [vmem:[%s3 + $0x80] sm:$0xff]
    %v153 = vld [vmem:[%s3 + $0x88] sm:$0xff]
    %v154 = vld [vmem:[%s3 + $0x90] sm:$0xff]
    %v155 = vld [vmem:[%s3 + $0x98] sm:$0xff]
    %v156 = vld [vmem:[%s3 + $0xa0] sm:$0xff]
    %v157 = vld [vmem:[%s3 + $0xa8] sm:$0xff]
    %v158 = vld [vmem:[%s3 + $0xb0] sm:$0xff]
    %v159 = vld [vmem:[%s3 + $0xb8] sm:$0xff]
    %v160 = vld [vmem:[%s3 + $0xc0] sm:$0xff]
    %v161 = vld [vmem:[%s3 + $0xc8] sm:$0xff]
    %v162 = vld [vmem:[%s3 + $0xd0] sm:$0xff]
    %v163 = vld [vmem:[%s3 + $0xd8] sm:$0xff]
    %v164 = vld [vmem:[%s3 + $0xe0] sm:$0xff]
    %v165 = vld [vmem:[%s3 + $0xe8] sm:$0xff]
    %v166 = vld [vmem:[%s3 + $0xf0] sm:$0xff]
    %v167 = vld [vmem:[%s3 + $0xf8] sm:$0xff]
    %v168 = vld [vmem:[%s3 + $0x100] sm:$0xff]
    %v169 = vld [vmem:[%s3 + $0x108] sm:$0xff]
    %v170 = vld [vmem:[%s3 + $0x110] sm:$0xff]
    %v171 = vld [vmem:[%s3 + $0x118] sm:$0xff]
    %v172 = vld [vmem:[%s4] sm:$0x1]
    %vm173 = vcmask 261120
    %v175 = vsel %vm173, %v135, 0
    %177 = vmatpush.msra.mxu0 %v151
    %178 = vmatpush.msra.mxu0 %v150
    %179 = vmatpush.msra.mxu0 %v149
    %180 = vmatpush.msra.mxu0 %v148
    %181 = vmatpush.msra.mxu0 %v147
    %182 = vmatpush.msra.mxu0 %v146
    %183 = vmatpush.msra.mxu0 %v145
    %184 = vmatpush.msra.mxu0 %v144
    %185 = vmatpush.msra.mxu0 %v143
    %186 = vmatpush.msra.mxu0 %v142
    %187 = vmatpush.msra.mxu0 %v141
    %188 = vmatpush.msra.mxu0 %v140
    %189 = vmatpush.msra.mxu0 %v139
    %190 = vmatpush.msra.mxu0 %v138
    %191 = vmatpush.msra.mxu0 %v137
    %192 = vmatpush.msra.mxu0 %v136
    %193 = vmatmul.f32.gmra.mxu0 %v133
    %v194 = vpop.f32.mrf.mxu0
    %v195 = vadd.f32 %v172, %v194
    %196 = vdwg.mxu0
    %197 = vmatpush.msra.mxu0 %v167
    %198 = vmatpush.msra.mxu0 %v166
    %199 = vmatpush.msra.mxu0 %v165
    %200 = vmatpush.msra.mxu0 %v164
    %201 = vmatpush.msra.mxu0 %v163
    %202 = vmatpush.msra.mxu0 %v162
    %203 = vmatpush.msra.mxu0 %v161
    %204 = vmatpush.msra.mxu0 %v160
    %205 = vmatpush.msra.mxu0 %v159
    %206 = vmatpush.msra.mxu0 %v158
    %207 = vmatpush.msra.mxu0 %v157
    %208 = vmatpush.msra.mxu0 %v156
    %209 = vmatpush.msra.mxu0 %v155
    %210 = vmatpush.msra.mxu0 %v154
    %211 = vmatpush.msra.mxu0 %v153
    %212 = vmatpush.msra.mxu0 %v152
    %213 = vmatmul.f32.gmra.mxu0 %v134
    %v214 = vpop.f32.mrf.mxu0
    %v215 = vadd.f32 %v195, %v214
    %216 = vdwg.mxu0
    %217 = vmatpush.msra.mxu0 0.0
    %218 = vmatpush.msra.mxu0 0.0
    %219 = vmatpush.msra.mxu0 0.0
    %220 = vmatpush.msra.mxu0 0.0
    %221 = vmatpush.msra.mxu0 0.0
    %222 = vmatpush.msra.mxu0 0.0
    %223 = vmatpush.msra.mxu0 0.0
    %224 = vmatpush.msra.mxu0 0.0
    %225 = vmatpush.msra.mxu0 0.0
    %226 = vmatpush.msra.mxu0 0.0
    %227 = vmatpush.msra.mxu0 0.0
    %228 = vmatpush.msra.mxu0 0.0
    %229 = vmatpush.msra.mxu0 %v171
    %230 = vmatpush.msra.mxu0 %v170
    %231 = vmatpush.msra.mxu0 %v169
    %232 = vmatpush.msra.mxu0 %v168
    %233 = vmatmul.f32.gmra.mxu0 %v175
    %v234 = vpop.f32.mrf.mxu0
    %v235 = vadd.f32 %v215, %v234
    %236 = vdwg.mxu0
    %v237 = vmul.f32 %v235, 0.11111111
    %vm238 = vcmask 16384
    %239 = vst.msk [vmem:[#allocation2] sm:$0x1] %vm238, %v237
    // Predicated region
    $region22: #{tpu_custom_call.1} parent=1 // pred_check
      _
    $region23: #{tpu_custom_call.1} parent=1 // pred_check_branch
      %241 = sbr.rel (0) target = $region25
    $region24: #{tpu_custom_call.1} parent=1 // pred_region
      %243 = vsyncadd [#allocation3], 0
      %s245 = sshll.u32 [#allocation2], 4
      %s246 = int_to_ptr.vmem [resolvable:$true] %s245
      %s247 = sshll.u32 %s5, 4
      %s248 = int_to_ptr.hbm [resolvable:$true] %s247
      %250 = dma.vmem_to_hbm [thread:$0]  %s246, 16, %s248, [#allocation3]
    $region25: #{tpu_custom_call.1} parent=1 // pred_fallthru
      _
    // Predicated region
    $region26: #{tpu_custom_call.1} parent=1 // pred_check
      _
    $region27: #{tpu_custom_call.1} parent=1 // pred_check_branch
      %252 = sbr.rel (0) target = $region29
    $region28: #{tpu_custom_call.1} parent=1 // pred_region
      %254 = dma.done [#allocation3], 16
    $region29: #{tpu_custom_call.1} parent=1 // pred_fallthru
      _
    %255 = vsyncpa [#allocation3], 1

</llo_original>
